<compile_context>
chip_gen: v7x
topology: tpu7x:2x2x1
jax: 0.10.0
libtpu: 0.0.40
codegen_flags: <defaults>
</compile_context>

<pallas_src>
import math

import jax
import jax.numpy as jnp
from jax.experimental import pallas as pl
from jax.experimental.pallas import tpu as pltpu


def _round_up(v, m):
    return ((v + m - 1) // m) * m


def _two_layer_kernel(x_ref, w1_ref, b1_ref, w2_ref, b2_ref, out_ref):
    # x_ref: (TM, D) f32    w1_ref: (D, Hp) bf16   b1_ref: (1, Hp) f32
    # w2_ref: (Hp, Cp) bf16 b2_ref: (1, Cp) f32    out_ref: (TM, Cp) bf16
    # In-kernel f32 -> bf16 cast: free VPU filler, avoids a wrapper-side astype
    # pass over the dominant activation array.
    x = x_ref[...].astype(jnp.bfloat16)

    # fc1 on the MXU (bf16 inputs, f32 accumulation), bias + ReLU in f32.
    h = jnp.dot(x, w1_ref[...], preferred_element_type=jnp.float32) + b1_ref[...]
    h = jnp.maximum(h, 0.0)

    # fc2 on the MXU; activations back to bf16 for the bf16 MXU path.
    scores = jnp.dot(h.astype(jnp.bfloat16), w2_ref[...],
                     preferred_element_type=jnp.float32) + b2_ref[...]
    out_ref[...] = scores.astype(out_ref.dtype)  # bf16 final store (f32 accum)


def prepare_params(w1, b1, w2, b2):
    """Pad hidden/class dims to 128 lanes and cast weights to bf16 -- once.

    Weights are stored as (in, out), i.e. transposed vs. nn.Linear's (out, in),
    so the kernel computes row-major  out = relu(x @ w1 + b1) @ w2 + b2.
    Zero padding contributes nothing to the math.
    """
    hidden, n_classes = w2.shape
    hp = _round_up(hidden, 128)
    cp = _round_up(n_classes, 128)
    w1_p = jnp.pad(w1, ((0, 0), (0, hp - hidden))).astype(jnp.bfloat16)
    b1_p = jnp.pad(b1, (0, hp - hidden)).reshape(1, hp).astype(jnp.float32)
    w2_p = jnp.pad(w2, ((0, hp - hidden), (0, cp - n_classes))).astype(jnp.bfloat16)
    b2_p = jnp.pad(b2, (0, cp - n_classes)).reshape(1, cp).astype(jnp.float32)
    return (w1_p, b1_p, w2_p, b2_p), n_classes


def _pick_tm(n, in_features, block_rows, *, min_steps=2,
             x_tile_budget_bytes=24 * 1024 * 1024):
    """Batch tile: multiple of 8, capped by block_rows and a VMEM budget for the
    double-buffered f32 x tile, and small enough to give >= min_steps grid steps
    (so both v7x TensorCores get work) unless the batch is tiny."""
    tm = min(block_rows, _round_up(n, 8))
    budget_rows = max(8, (x_tile_budget_bytes // (2 * 4 * in_features)) // 8 * 8)
    tm = min(tm, budget_rows)
    if n > 8 * min_steps:
        tm = min(tm, max(8, _round_up(pl.cdiv(n, min_steps), 8)))
    return tm


def two_layer_nn_forward(images, prepared_params, n_classes, *, block_rows=2048):
    """images: (N, C, H, W) float32. Returns (N, n_classes) float32 scores."""
    w1_p, b1_p, w2_p, b2_p = prepared_params
    n = images.shape[0]
    in_features = w1_p.shape[0]
    hp = w1_p.shape[1]
    cp = w2_p.shape[1]

    # Flatten NCHW -> (N, D); keep the source dtype (f32), no pad, no copy.
    x = images.reshape(n, in_features)

    tm = _pick_tm(n, in_features, block_rows)
    grid_n = pl.cdiv(n, tm)  # partial last block; OOB rows discarded

    # Double-buffered x (f32) + out (bf16) tiles, resident bf16 weights, slack.
    vmem_bytes = 2 * (tm * in_features * 4 + tm * cp * 2)
    vmem_bytes += in_features * hp * 2 + hp * cp * 2 + (hp + cp) * 4
    vmem_limit = min(48 * 1024 * 1024,                  # stay safe on v7x (64 MiB)
                     max(32 * 1024 * 1024, int(vmem_bytes * 1.5)))

    out = pl.pallas_call(
        _two_layer_kernel,
        out_shape=jax.ShapeDtypeStruct((n, cp), jnp.bfloat16),
        grid=(grid_n,),
        in_specs=[
            pl.BlockSpec((tm, in_features), lambda i: (i, 0)),  # x: tiled over N
            pl.BlockSpec((in_features, hp), lambda i: (0, 0)),  # w1: resident
            pl.BlockSpec((1, hp), lambda i: (0, 0)),            # b1: resident
            pl.BlockSpec((hp, cp), lambda i: (0, 0)),           # w2: resident
            pl.BlockSpec((1, cp), lambda i: (0, 0)),            # b2: resident
        ],
        out_specs=pl.BlockSpec((tm, cp), lambda i: (i, 0)),
        compiler_params=pltpu.CompilerParams(
            dimension_semantics=("parallel",),   # shard batch tiles across TCs (v7x)
            vmem_limit_bytes=vmem_limit,
        ),
    )(x, w1_p, b1_p, w2_p, b2_p)

    # Slice away class padding; return f32 to match the module's interface.
    return out[:, :n_classes].astype(jnp.float32)


def init_params(key, in_features, hidden_dim, n_classes):
    """Deterministic init matching nn.Linear's U(-1/sqrt(fan_in), 1/sqrt(fan_in))."""
    k1, k2, k3, k4 = jax.random.split(key, 4)
    bound1 = 1.0 / math.sqrt(in_features)
    bound2 = 1.0 / math.sqrt(hidden_dim)
    # Stored as (in, out) -- transposed vs. PyTorch's (out, in) weight layout.
    w1 = jax.random.uniform(k1, (in_features, hidden_dim), jnp.float32,
                            -bound1, bound1)
    b1 = jax.random.uniform(k2, (hidden_dim,), jnp.float32, -bound1, bound1)
    w2 = jax.random.uniform(k3, (hidden_dim, n_classes), jnp.float32,
                            -bound2, bound2)
    b2 = jax.random.uniform(k4, (n_classes,), jnp.float32, -bound2, bound2)
    return w1, b1, w2, b2


if __name__ == "__main__":
    # Small shapes consistent with the module: im_size = (4, 16, 16)
    N, C, H, W = 2, 4, 16, 16
    hidden_dim = 32
    n_classes = 10
    in_features = C * H * W  # 1024

    key = jax.random.PRNGKey(0)
    k_img, k_par = jax.random.split(key)
    images = jax.random.normal(k_img, (N, C, H, W), jnp.float32)
    w1, b1, w2, b2 = init_params(k_par, in_features, hidden_dim, n_classes)

    prepared, n_cls = prepare_params(w1, b1, w2, b2)   # pad/cast once, not per call
    scores = two_layer_nn_forward(images, prepared, n_cls)
    scores = jax.block_until_ready(scores)
    assert scores.shape == (N, n_classes)

    # Reference in plain JAX using the same bf16-MXU / f32-accumulate path.
    x_flat = images.reshape(N, in_features).astype(jnp.bfloat16)
    h_ref = jnp.maximum(
        jnp.dot(x_flat, w1.astype(jnp.bfloat16),
                preferred_element_type=jnp.float32) + b1, 0.0)
    ref = jnp.dot(h_ref.astype(jnp.bfloat16), w2.astype(jnp.bfloat16),
                  preferred_element_type=jnp.float32) + b2
    assert jnp.allclose(scores, ref, atol=2e-2, rtol=2e-2)

    # Loose sanity check against the full-f32 math (bf16 cast/store error only).
    ref_f32 = jnp.maximum(images.reshape(N, in_features) @ w1 + b1, 0.0) @ w2 + b2
    assert jnp.allclose(scores, ref_f32, atol=5e-2, rtol=5e-2)

    print("KERNEL_OK")
</pallas_src>

<mosaic_0001>
module attributes {stable_mosaic.version = 11 : i64} {
  func.func @_two_layer_kernel(%arg0: i32, %arg1: memref<8x1024xf32, #tpu.memory_space<vmem>>, %arg2: memref<1024x128xbf16, #tpu.memory_space<vmem>>, %arg3: memref<1x128xf32, #tpu.memory_space<vmem>>, %arg4: memref<128x128xbf16, #tpu.memory_space<vmem>>, %arg5: memref<1x128xf32, #tpu.memory_space<vmem>>, %arg6: memref<8x128xbf16, #tpu.memory_space<vmem>>) attributes {dimension_semantics = [#tpu.dimension_semantics<parallel>], iteration_bounds = array<i64: 1>, scalar_prefetch = 0 : i64, scratch_operands = 0 : i64, tpu.core_type = #tpu.core_type<tc>, window_params = [{transform_indices = @transform_0, window_bounds = array<i64: 8, 1024>}, {pipeline_mode = #tpu.pipeline_mode<synchronous>, transform_indices = @transform_1, window_bounds = array<i64: 1024, 128>}, {pipeline_mode = #tpu.pipeline_mode<synchronous>, transform_indices = @transform_2, window_bounds = array<i64: 1, 128>}, {pipeline_mode = #tpu.pipeline_mode<synchronous>, transform_indices = @transform_3, window_bounds = array<i64: 128, 128>}, {pipeline_mode = #tpu.pipeline_mode<synchronous>, transform_indices = @transform_4, window_bounds = array<i64: 1, 128>}, {transform_indices = @transform_5, window_bounds = array<i64: 8, 128>}]} {
    %c0 = arith.constant 0 : index
    %c0_0 = arith.constant 0 : index
    %0 = vector.load %arg1[%c0, %c0_0] : memref<8x1024xf32, #tpu.memory_space<vmem>>, vector<8x1024xf32>
    %1 = arith.truncf %0 : vector<8x1024xf32> to vector<8x1024xbf16>
    %c0_1 = arith.constant 0 : index
    %c0_2 = arith.constant 0 : index
    %2 = vector.load %arg2[%c0_1, %c0_2] : memref<1024x128xbf16, #tpu.memory_space<vmem>>, vector<1024x128xbf16>
    %cst = arith.constant dense<0.000000e+00> : vector<8x128xf32>
    %3 = tpu.matmul %1, %2, %cst {dimension_numbers = #tpu.dot_dimension_numbers<[1], [0], [0], [1], [0, 0, 1, 1], [], []>} : vector<8x1024xbf16>, vector<1024x128xbf16>, vector<8x128xf32> -> vector<8x128xf32>
    %c0_3 = arith.constant 0 : index
    %c0_4 = arith.constant 0 : index
    %4 = vector.load %arg3[%c0_3, %c0_4] : memref<1x128xf32, #tpu.memory_space<vmem>>, vector<1x128xf32>
    %5 = vector.broadcast %4 : vector<1x128xf32> to vector<8x128xf32>
    %6 = arith.addf %3, %5 : vector<8x128xf32>
    %cst_5 = arith.constant 0.000000e+00 : f32
    %7 = vector.broadcast %cst_5 : f32 to vector<8x128xf32>
    %8 = arith.maximumf %6, %7 : vector<8x128xf32>
    %9 = arith.truncf %8 : vector<8x128xf32> to vector<8x128xbf16>
    %c0_6 = arith.constant 0 : index
    %c0_7 = arith.constant 0 : index
    %10 = vector.load %arg4[%c0_6, %c0_7] : memref<128x128xbf16, #tpu.memory_space<vmem>>, vector<128x128xbf16>
    %cst_8 = arith.constant dense<0.000000e+00> : vector<8x128xf32>
    %11 = tpu.matmul %9, %10, %cst_8 {dimension_numbers = #tpu.dot_dimension_numbers<[1], [0], [0], [1], [0, 0, 1, 1], [], []>} : vector<8x128xbf16>, vector<128x128xbf16>, vector<8x128xf32> -> vector<8x128xf32>
    %c0_9 = arith.constant 0 : index
    %c0_10 = arith.constant 0 : index
    %12 = vector.load %arg5[%c0_9, %c0_10] : memref<1x128xf32, #tpu.memory_space<vmem>>, vector<1x128xf32>
    %13 = vector.broadcast %12 : vector<1x128xf32> to vector<8x128xf32>
    %14 = arith.addf %11, %13 : vector<8x128xf32>
    %15 = arith.truncf %14 : vector<8x128xf32> to vector<8x128xbf16>
    %c0_11 = arith.constant 0 : index
    %c0_12 = arith.constant 0 : index
    %16 = vector.load %arg6[%c0_11, %c0_12] : memref<8x128xbf16, #tpu.memory_space<vmem>>, vector<8x128xbf16>
    tpu.vector_store %arg6[%c0_11, %c0_12], %15 {strides = array<i32>} : memref<8x128xbf16, #tpu.memory_space<vmem>>, vector<8x128xbf16>,
    return
  }
  func.func @transform_0(%arg0: i32) -> (i32, i32) {
    %c0_i32 = arith.constant 0 : i32
    %c0_i32_0 = arith.constant 0 : i32
    return %arg0, %c0_i32 : i32, i32
  }
  func.func @transform_1(%arg0: i32) -> (i32, i32) {
    %c0_i32 = arith.constant 0 : i32
    %c0_i32_0 = arith.constant 0 : i32
    %c0_i32_1 = arith.constant 0 : i32
    return %c0_i32, %c0_i32_0 : i32, i32
  }
  func.func @transform_2(%arg0: i32) -> (i32, i32) {
    %c0_i32 = arith.constant 0 : i32
    %c0_i32_0 = arith.constant 0 : i32
    %c0_i32_1 = arith.constant 0 : i32
    return %c0_i32, %c0_i32_0 : i32, i32
  }
  func.func @transform_3(%arg0: i32) -> (i32, i32) {
    %c0_i32 = arith.constant 0 : i32
    %c0_i32_0 = arith.constant 0 : i32
    %c0_i32_1 = arith.constant 0 : i32
    return %c0_i32, %c0_i32_0 : i32, i32
  }
  func.func @transform_4(%arg0: i32) -> (i32, i32) {
    %c0_i32 = arith.constant 0 : i32
    %c0_i32_0 = arith.constant 0 : i32
    %c0_i32_1 = arith.constant 0 : i32
    return %c0_i32, %c0_i32_0 : i32, i32
  }
  func.func @transform_5(%arg0: i32) -> (i32, i32) {
    %c0_i32 = arith.constant 0 : i32
    %c0_i32_0 = arith.constant 0 : i32
    return %arg0, %c0_i32 : i32, i32
  }
}

</mosaic_0001>

<llo_original>
// kernel: tpu_custom_call.1
$region0: #{tpu_custom_call.1}
  #allocation0 [shape = 'u32[]', space=smem, size = 0x4, offset = 0x4, fixed_abs, tag = 'smem constant byte address 0x4 - core index']
  #allocation1 [shape = 'u32[144,128]{1,0:T(1,128)}', space=vmem, size = 0x12000, scoped, tag = 'internal scratch']
  %s0 = inlined_call_operand.hbm [shape: f32[2,1024], index: 0, kind: input, shape index: {}]
  %s1 = inlined_call_operand.hbm [shape: bf16[1024,128], index: 1, kind: input, shape index: {}]
  %s2 = inlined_call_operand.vmem [shape: f32[1,128], index: 2, kind: input, shape index: {}]
  %s3 = inlined_call_operand.hbm [shape: bf16[128,128], index: 3, kind: input, shape index: {}]
  %s4 = inlined_call_operand.vmem [shape: f32[1,128], index: 4, kind: input, shape index: {}]
  %s5 = inlined_call_operand.hbm [shape: bf16[2,128], index: 5, kind: output, shape index: {}]
  %s6 = sld [smem:[#allocation0]]
  $region42: #{tpu_custom_call.1} parent=0
    _
  %s8 = ssub.s32 1, %s6
  %s9 = scalar_select 0, %s8, %s6
  $region1: #{tpu_custom_call.1} parent=0
    #allocation2 [shape = 'u8[32768]{0}', space=vmem, size = 0x8000, scoped, tag = 'input window, operand 0, single buffered']
    #allocation3 [shape = 's32[1]{0}', space=sflag, size = 0x4, scoped, tag = 'scoped memory for tpu_custom_call.1']
    #allocation4 [shape = 's32[1]{0}', space=sflag, size = 0x4, scoped, tag = 'scoped memory for tpu_custom_call.1']
    #allocation5 [shape = 'u8[262144]{0}', space=vmem, size = 0x40000, scoped, tag = 'input window, operand 1, single buffered']
    #allocation6 [shape = 's32[1]{0}', space=sflag, size = 0x4, scoped, tag = 'scoped memory for tpu_custom_call.1']
    #allocation7 [shape = 'u8[32768]{0}', space=vmem, size = 0x8000, scoped, tag = 'input window, operand 3, single buffered']
    #allocation8 [shape = 'u8[2048]{0}', space=vmem, size = 0x800, scoped, tag = 'output window, operand 0, single buffered']
    %10 = vsyncpa [#allocation3], 0
    %11 = vsyncpa [#allocation6], 0
    %12 = vsyncpa [#allocation4], 0
    // Predicated region
    $region2: #{tpu_custom_call.1} parent=1 // pred_check
      _
    $region3: #{tpu_custom_call.1} parent=1 // pred_check_branch
      %14 = sbr.rel (0) target = $region5
    $region4: #{tpu_custom_call.1} parent=1 // pred_region
      %s16 = ssub.s32 1024, 256
      %17 = vsyncadd [#allocation3], %s16
      %s18 = sshll.u32 [#allocation2], 4
      %s19 = int_to_ptr.vmem [resolvable:$true] %s18
      %24 = dma.hbm_to_vmem [thread:$0]  %s0, 256, %s19, [#allocation3], 256, 256, 16
    $region5: #{tpu_custom_call.1} parent=1 // pred_fallthru
      _
    // Predicated region
    $region6: #{tpu_custom_call.1} parent=1 // pred_check
      _
    $region7: #{tpu_custom_call.1} parent=1 // pred_check_branch
      %26 = sbr.rel (0) target = $region9
    $region8: #{tpu_custom_call.1} parent=1 // pred_region
      %s28 = ssub.s32 8192, 8192
      %29 = vsyncadd [#allocation6], %s28
      %s30 = sshll.u32 [#allocation5], 4
      %s31 = int_to_ptr.vmem [resolvable:$true] %s30
      %36 = dma.hbm_to_vmem [thread:$0]  %s1, 8192, %s31, [#allocation6], 64, 64, 4
    $region9: #{tpu_custom_call.1} parent=1 // pred_fallthru
      _
    // Predicated region
    $region10: #{tpu_custom_call.1} parent=1 // pred_check
      _
    $region11: #{tpu_custom_call.1} parent=1 // pred_check_branch
      %38 = sbr.rel (0) target = $region13
    $region12: #{tpu_custom_call.1} parent=1 // pred_region
      _
    $region13: #{tpu_custom_call.1} parent=1 // pred_fallthru
      _
    // Predicated region
    $region14: #{tpu_custom_call.1} parent=1 // pred_check
      _
    $region15: #{tpu_custom_call.1} parent=1 // pred_check_branch
      %40 = sbr.rel (0) target = $region17
    $region16: #{tpu_custom_call.1} parent=1 // pred_region
      %s42 = ssub.s32 1024, 1024
      %43 = vsyncadd [#allocation6], %s42
      %s44 = sshll.u32 [#allocation7], 4
      %s45 = int_to_ptr.vmem [resolvable:$true] %s44
      %50 = dma.hbm_to_vmem [thread:$0]  %s3, 1024, %s45, [#allocation6], 64, 64, 4
    $region17: #{tpu_custom_call.1} parent=1 // pred_fallthru
      _
    // Predicated region
    $region18: #{tpu_custom_call.1} parent=1 // pred_check
      _
    $region19: #{tpu_custom_call.1} parent=1 // pred_check_branch
      %52 = sbr.rel (0) target = $region21
    $region20: #{tpu_custom_call.1} parent=1 // pred_region
      _
    $region21: #{tpu_custom_call.1} parent=1 // pred_fallthru
      _
    // Predicated region
    $region22: #{tpu_custom_call.1} parent=1 // pred_check
      _
    $region23: #{tpu_custom_call.1} parent=1 // pred_check_branch
      %54 = sbr.rel (0) target = $region25
    $region24: #{tpu_custom_call.1} parent=1 // pred_region
      %55 = dma.done [#allocation3], 1024
    $region25: #{tpu_custom_call.1} parent=1 // pred_fallthru
      _
    // Predicated region
    $region26: #{tpu_custom_call.1} parent=1 // pred_check
      _
    $region27: #{tpu_custom_call.1} parent=1 // pred_check_branch
      %57 = sbr.rel (0) target = $region29
    $region28: #{tpu_custom_call.1} parent=1 // pred_region
      %58 = dma.done [#allocation6], 8192
    $region29: #{tpu_custom_call.1} parent=1 // pred_fallthru
      _
    // Predicated region
    $region30: #{tpu_custom_call.1} parent=1 // pred_check
      _
    $region31: #{tpu_custom_call.1} parent=1 // pred_check_branch
      %60 = sbr.rel (0) target = $region33
    $region32: #{tpu_custom_call.1} parent=1 // pred_region
      %61 = dma.done [#allocation6], 1024
    $region33: #{tpu_custom_call.1} parent=1 // pred_fallthru
      _
    %v63 = vld [vmem:[#allocation2] sm:$0xff]
    %v64 = vld [vmem:[#allocation2 + $0x8] sm:$0xff]
    %v65 = vld [vmem:[#allocation2 + $0x10] sm:$0xff]
    %v66 = vld [vmem:[#allocation2 + $0x18] sm:$0xff]
    %v67 = vld [vmem:[#allocation2 + $0x20] sm:$0xff]
    %v68 = vld [vmem:[#allocation2 + $0x28] sm:$0xff]
    %v69 = vld [vmem:[#allocation2 + $0x30] sm:$0xff]
    %v70 = vld [vmem:[#allocation2 + $0x38] sm:$0xff]
    %v79 = vcombine.low %v63, %v65
    %v80 = vcombine.high %v63, %v65
    %v81 = vcombine.low %v67, %v69
    %v82 = vcombine.high %v67, %v69
    %v84 = vunpack.c.l.s4 1983009808
    %v85 = vunpack.c.0.s8 %v84
    %v86 = vlaneseq
    %v87 = vshrl.u32 %v86, 7
    %v88 = vsub.s32 %v85, %v87
    %v89 = vrot.slane %v79, %v88
    %v91 = vunpack.c.l.s4 1983009808
    %v92 = vunpack.c.0.s8 %v91
    %v93 = vlaneseq
    %v94 = vshrl.u32 %v93, 7
    %v95 = vsub.s32 %v92, %v94
    %v96 = vrot.slane %v80, %v95
    %v98 = vunpack.c.l.s4 1983009808
    %v99 = vunpack.c.0.s8 %v98
    %v100 = vlaneseq
    %v101 = vshrl.u32 %v100, 7
    %v102 = vsub.s32 %v99, %v101
    %v103 = vrot.slane %v81, %v102
    %v105 = vunpack.c.l.s4 1983009808
    %v106 = vunpack.c.0.s8 %v105
    %v107 = vlaneseq
    %v108 = vshrl.u32 %v107, 7
    %v109 = vsub.s32 %v106, %v108
    %v110 = vrot.slane %v82, %v109
    %v111 = vcombine.low %v89, %v103
    %v112 = vcombine.high %v89, %v103
    %v113 = vcombine.low %v96, %v110
    %v114 = vcombine.high %v96, %v110
    %v115 = vcombine.low %v64, %v66
    %v116 = vcombine.high %v64, %v66
    %v117 = vcombine.low %v68, %v70
    %v118 = vcombine.high %v68, %v70
    %v120 = vunpack.c.l.s4 1983009808
    %v121 = vunpack.c.0.s8 %v120
    %v122 = vlaneseq
    %v123 = vshrl.u32 %v122, 7
    %v124 = vsub.s32 %v121, %v123
    %v125 = vrot.slane %v115, %v124
    %v127 = vunpack.c.l.s4 1983009808
    %v128 = vunpack.c.0.s8 %v127
    %v129 = vlaneseq
    %v130 = vshrl.u32 %v129, 7
    %v131 = vsub.s32 %v128, %v130
    %v132 = vrot.slane %v116, %v131
    %v134 = vunpack.c.l.s4 1983009808
    %v135 = vunpack.c.0.s8 %v134
    %v136 = vlaneseq
    %v137 = vshrl.u32 %v136, 7
    %v138 = vsub.s32 %v135, %v137
    %v139 = vrot.slane %v117, %v138
    %v141 = vunpack.c.l.s4 1983009808
    %v142 = vunpack.c.0.s8 %v141
    %v143 = vlaneseq
    %v144 = vshrl.u32 %v143, 7
    %v145 = vsub.s32 %v142, %v144
    %v146 = vrot.slane %v118, %v145
    %v147 = vcombine.low %v125, %v139
    %v148 = vcombine.high %v125, %v139
    %v149 = vcombine.low %v132, %v146
    %v150 = vcombine.high %v132, %v146
    %v159 = vpack.c.bf16 %v111, %v111
    %v160 = vpack.c.bf16 %v112, %v112
    %v161 = vpack.c.bf16 %v113, %v113
    %v162 = vpack.c.bf16 %v114, %v114
    %v163 = vpack.c.bf16 %v147, %v147
    %v164 = vpack.c.bf16 %v148, %v148
    %v165 = vpack.c.bf16 %v149, %v149
    %v166 = vpack.c.bf16 %v150, %v150
    %v167 = vld [vmem:[#allocation5] sm:$0xf]
    %v168 = vld [vmem:[#allocation5 + $0x4] sm:$0xf]
    %v169 = vld [vmem:[#allocation5 + $0x8] sm:$0xf]
    %v170 = vld [vmem:[#allocation5 + $0xc] sm:$0xf]
    %v171 = vld [vmem:[#allocation5 + $0x10] sm:$0xf]
    %v172 = vld [vmem:[#allocation5 + $0x14] sm:$0xf]
    %v173 = vld [vmem:[#allocation5 + $0x18] sm:$0xf]
    %v174 = vld [vmem:[#allocation5 + $0x1c] sm:$0xf]
    %v175 = vld [vmem:[#allocation5 + $0x20] sm:$0xf]
    %v176 = vld [vmem:[#allocation5 + $0x24] sm:$0xf]
    %v177 = vld [vmem:[#allocation5 + $0x28] sm:$0xf]
    %v178 = vld [vmem:[#allocation5 + $0x2c] sm:$0xf]
    %v179 = vld [vmem:[#allocation5 + $0x30] sm:$0xf]
    %v180 = vld [vmem:[#allocation5 + $0x34] sm:$0xf]
    %v181 = vld [vmem:[#allocation5 + $0x38] sm:$0xf]
    %v182 = vld [vmem:[#allocation5 + $0x3c] sm:$0xf]
    %v183 = vld [vmem:[#allocation5 + $0x40] sm:$0xf]
    %v184 = vld [vmem:[#allocation5 + $0x44] sm:$0xf]
    %v185 = vld [vmem:[#allocation5 + $0x48] sm:$0xf]
    %v186 = vld [vmem:[#allocation5 + $0x4c] sm:$0xf]
    %v187 = vld [vmem:[#allocation5 + $0x50] sm:$0xf]
    %v188 = vld [vmem:[#allocation5 + $0x54] sm:$0xf]
    %v189 = vld [vmem:[#allocation5 + $0x58] sm:$0xf]
    %v190 = vld [vmem:[#allocation5 + $0x5c] sm:$0xf]
    %v191 = vld [vmem:[#allocation5 + $0x60] sm:$0xf]
    %v192 = vld [vmem:[#allocation5 + $0x64] sm:$0xf]
    %v193 = vld [vmem:[#allocation5 + $0x68] sm:$0xf]
    %v194 = vld [vmem:[#allocation5 + $0x6c] sm:$0xf]
    %v195 = vld [vmem:[#allocation5 + $0x70] sm:$0xf]
    %v196 = vld [vmem:[#allocation5 + $0x74] sm:$0xf]
    %v197 = vld [vmem:[#allocation5 + $0x78] sm:$0xf]
    %v198 = vld [vmem:[#allocation5 + $0x7c] sm:$0xf]
    %v199 = vld [vmem:[#allocation5 + $0x80] sm:$0xf]
    %v200 = vld [vmem:[#allocation5 + $0x84] sm:$0xf]
    %v201 = vld [vmem:[#allocation5 + $0x88] sm:$0xf]
    %v202 = vld [vmem:[#allocation5 + $0x8c] sm:$0xf]
    %v203 = vld [vmem:[#allocation5 + $0x90] sm:$0xf]
    %v204 = vld [vmem:[#allocation5 + $0x94] sm:$0xf]
    %v205 = vld [vmem:[#allocation5 + $0x98] sm:$0xf]
    %v206 = vld [vmem:[#allocation5 + $0x9c] sm:$0xf]
    %v207 = vld [vmem:[#allocation5 + $0xa0] sm:$0xf]
    %v208 = vld [vmem:[#allocation5 + $0xa4] sm:$0xf]
    %v209 = vld [vmem:[#allocation5 + $0xa8] sm:$0xf]
    %v210 = vld [vmem:[#allocation5 + $0xac] sm:$0xf]
    %v211 = vld [vmem:[#allocation5 + $0xb0] sm:$0xf]
    %v212 = vld [vmem:[#allocation5 + $0xb4] sm:$0xf]
    %v213 = vld [vmem:[#allocation5 + $0xb8] sm:$0xf]
    %v214 = vld [vmem:[#allocation5 + $0xbc] sm:$0xf]
    %v215 = vld [vmem:[#allocation5 + $0xc0] sm:$0xf]
    %v216 = vld [vmem:[#allocation5 + $0xc4] sm:$0xf]
    %v217 = vld [vmem:[#allocation5 + $0xc8] sm:$0xf]
    %v218 = vld [vmem:[#allocation5 + $0xcc] sm:$0xf]
    %v219 = vld [vmem:[#allocation5 + $0xd0] sm:$0xf]
    %v220 = vld [vmem:[#allocation5 + $0xd4] sm:$0xf]
    %v221 = vld [vmem:[#allocation5 + $0xd8] sm:$0xf]
    %v222 = vld [vmem:[#allocation5 + $0xdc] sm:$0xf]
    %v223 = vld [vmem:[#allocation5 + $0xe0] sm:$0xf]
    %v224 = vld [vmem:[#allocation5 + $0xe4] sm:$0xf]
    %v225 = vld [vmem:[#allocation5 + $0xe8] sm:$0xf]
    %v226 = vld [vmem:[#allocation5 + $0xec] sm:$0xf]
    %v227 = vld [vmem:[#allocation5 + $0xf0] sm:$0xf]
    %v228 = vld [vmem:[#allocation5 + $0xf4] sm:$0xf]
    %v229 = vld [vmem:[#allocation5 + $0xf8] sm:$0xf]
    %v230 = vld [vmem:[#allocation5 + $0xfc] sm:$0xf]
    %v231 = vld [vmem:[#allocation5 + $0x100] sm:$0xf]
    %v232 = vld [vmem:[#allocation5 + $0x104] sm:$0xf]
    %v233 = vld [vmem:[#allocation5 + $0x108] sm:$0xf]
    %v234 = vld [vmem:[#allocation5 + $0x10c] sm:$0xf]
    %v235 = vld [vmem:[#allocation5 + $0x110] sm:$0xf]
    %v236 = vld [vmem:[#allocation5 + $0x114] sm:$0xf]
    %v237 = vld [vmem:[#allocation5 + $0x118] sm:$0xf]
    %v238 = vld [vmem:[#allocation5 + $0x11c] sm:$0xf]
    %v239 = vld [vmem:[#allocation5 + $0x120] sm:$0xf]
    %v240 = vld [vmem:[#allocation5 + $0x124] sm:$0xf]
    %v241 = vld [vmem:[#allocation5 + $0x128] sm:$0xf]
    %v242 = vld [vmem:[#allocation5 + $0x12c] sm:$0xf]
    %v243 = vld [vmem:[#allocation5 + $0x130] sm:$0xf]
    %v244 = vld [vmem:[#allocation5 + $0x134] sm:$0xf]
    %v245 = vld [vmem:[#allocation5 + $0x138] sm:$0xf]
    %v246 = vld [vmem:[#allocation5 + $0x13c] sm:$0xf]
    %v247 = vld [vmem:[#allocation5 + $0x140] sm:$0xf]
    %v248 = vld [vmem:[#allocation5 + $0x144] sm:$0xf]
    %v249 = vld [vmem:[#allocation5 + $0x148] sm:$0xf]
    %v250 = vld [vmem:[#allocation5 + $0x14c] sm:$0xf]
    %v251 = vld [vmem:[#allocation5 + $0x150] sm:$0xf]
    %v252 = vld [vmem:[#allocation5 + $0x154] sm:$0xf]
    %v253 = vld [vmem:[#allocation5 + $0x158] sm:$0xf]
    %v254 = vld [vmem:[#allocation5 + $0x15c] sm:$0xf]
    %v255 = vld [vmem:[#allocation5 + $0x160] sm:$0xf]
    %v256 = vld [vmem:[#allocation5 + $0x164] sm:$0xf]
    %v257 = vld [vmem:[#allocation5 + $0x168] sm:$0xf]
    %v258 = vld [vmem:[#allocation5 + $0x16c] sm:$0xf]
    %v259 = vld [vmem:[#allocation5 + $0x170] sm:$0xf]
    %v260 = vld [vmem:[#allocation5 + $0x174] sm:$0xf]
    %v261 = vld [vmem:[#allocation5 + $0x178] sm:$0xf]
    %v262 = vld [vmem:[#allocation5 + $0x17c] sm:$0xf]
    %v263 = vld [vmem:[#allocation5 + $0x180] sm:$0xf]
    %v264 = vld [vmem:[#allocation5 + $0x184] sm:$0xf]
    %v265 = vld [vmem:[#allocation5 + $0x188] sm:$0xf]
    %v266 = vld [vmem:[#allocation5 + $0x18c] sm:$0xf]
    %v267 = vld [vmem:[#allocation5 + $0x190] sm:$0xf]
    %v268 = vld [vmem:[#allocation5 + $0x194] sm:$0xf]
    %v269 = vld [vmem:[#allocation5 + $0x198] sm:$0xf]
    %v270 = vld [vmem:[#allocation5 + $0x19c] sm:$0xf]
    %v271 = vld [vmem:[#allocation5 + $0x1a0] sm:$0xf]
    %v272 = vld [vmem:[#allocation5 + $0x1a4] sm:$0xf]
    %v273 = vld [vmem:[#allocation5 + $0x1a8] sm:$0xf]
    %v274 = vld [vmem:[#allocation5 + $0x1ac] sm:$0xf]
    %v275 = vld [vmem:[#allocation5 + $0x1b0] sm:$0xf]
    %v276 = vld [vmem:[#allocation5 + $0x1b4] sm:$0xf]
    %v277 = vld [vmem:[#allocation5 + $0x1b8] sm:$0xf]
    %v278 = vld [vmem:[#allocation5 + $0x1bc] sm:$0xf]
    %v279 = vld [vmem:[#allocation5 + $0x1c0] sm:$0xf]
    %v280 = vld [vmem:[#allocation5 + $0x1c4] sm:$0xf]
    %v281 = vld [vmem:[#allocation5 + $0x1c8] sm:$0xf]
    %v282 = vld [vmem:[#allocation5 + $0x1cc] sm:$0xf]
    %v283 = vld [vmem:[#allocation5 + $0x1d0] sm:$0xf]
    %v284 = vld [vmem:[#allocation5 + $0x1d4] sm:$0xf]
    %v285 = vld [vmem:[#allocation5 + $0x1d8] sm:$0xf]
    %v286 = vld [vmem:[#allocation5 + $0x1dc] sm:$0xf]
    %v287 = vld [vmem:[#allocation5 + $0x1e0] sm:$0xf]
    %v288 = vld [vmem:[#allocation5 + $0x1e4] sm:$0xf]
    %v289 = vld [vmem:[#allocation5 + $0x1e8] sm:$0xf]
    %v290 = vld [vmem:[#allocation5 + $0x1ec] sm:$0xf]
    %v291 = vld [vmem:[#allocation5 + $0x1f0] sm:$0xf]
    %v292 = vld [vmem:[#allocation5 + $0x1f4] sm:$0xf]
    %v293 = vld [vmem:[#allocation5 + $0x1f8] sm:$0xf]
    %v294 = vld [vmem:[#allocation5 + $0x1fc] sm:$0xf]
    %v295 = vld [vmem:[%s2] sm:$0x1]
    %v297 = vlaneseq
    %v298 = vshrl.u32 %v297, 7
    %v299 = vsub.s32 0, %v298
    %v300 = vrot.slane %v295, %v299
    %v430 = vunpack.c.l.b16 %v167
    %v431 = vunpack.c.l.b16 %v168
    %v432 = vunpack.c.l.b16 %v169
    %v433 = vunpack.c.l.b16 %v170
    %v434 = vunpack.c.l.b16 %v171
    %v435 = vunpack.c.l.b16 %v172
    %v436 = vunpack.c.l.b16 %v173
    %v437 = vunpack.c.l.b16 %v174
    %v438 = vunpack.c.l.b16 %v175
    %v439 = vunpack.c.l.b16 %v176
    %v440 = vunpack.c.l.b16 %v177
    %v441 = vunpack.c.l.b16 %v178
    %v442 = vunpack.c.l.b16 %v179
    %v443 = vunpack.c.l.b16 %v180
    %v444 = vunpack.c.l.b16 %v181
    %v445 = vunpack.c.l.b16 %v182
    %v446 = vunpack.c.l.b16 %v183
    %v447 = vunpack.c.l.b16 %v184
    %v448 = vunpack.c.l.b16 %v185
    %v449 = vunpack.c.l.b16 %v186
    %v450 = vunpack.c.l.b16 %v187
    %v451 = vunpack.c.l.b16 %v188
    %v452 = vunpack.c.l.b16 %v189
    %v453 = vunpack.c.l.b16 %v190
    %v454 = vunpack.c.l.b16 %v191
    %v455 = vunpack.c.l.b16 %v192
    %v456 = vunpack.c.l.b16 %v193
    %v457 = vunpack.c.l.b16 %v194
    %v458 = vunpack.c.l.b16 %v195
    %v459 = vunpack.c.l.b16 %v196
    %v460 = vunpack.c.l.b16 %v197
    %v461 = vunpack.c.l.b16 %v198
    %v462 = vunpack.c.l.b16 %v199
    %v463 = vunpack.c.l.b16 %v200
    %v464 = vunpack.c.l.b16 %v201
    %v465 = vunpack.c.l.b16 %v202
    %v466 = vunpack.c.l.b16 %v203
    %v467 = vunpack.c.l.b16 %v204
    %v468 = vunpack.c.l.b16 %v205
    %v469 = vunpack.c.l.b16 %v206
    %v470 = vunpack.c.l.b16 %v207
    %v471 = vunpack.c.l.b16 %v208
    %v472 = vunpack.c.l.b16 %v209
    %v473 = vunpack.c.l.b16 %v210
    %v474 = vunpack.c.l.b16 %v211
    %v475 = vunpack.c.l.b16 %v212
    %v476 = vunpack.c.l.b16 %v213
    %v477 = vunpack.c.l.b16 %v214
    %v478 = vunpack.c.l.b16 %v215
    %v479 = vunpack.c.l.b16 %v216
    %v480 = vunpack.c.l.b16 %v217
    %v481 = vunpack.c.l.b16 %v218
    %v482 = vunpack.c.l.b16 %v219
    %v483 = vunpack.c.l.b16 %v220
    %v484 = vunpack.c.l.b16 %v221
    %v485 = vunpack.c.l.b16 %v222
    %v486 = vunpack.c.l.b16 %v223
    %v487 = vunpack.c.l.b16 %v224
    %v488 = vunpack.c.l.b16 %v225
    %v489 = vunpack.c.l.b16 %v226
    %v490 = vunpack.c.l.b16 %v227
    %v491 = vunpack.c.l.b16 %v228
    %v492 = vunpack.c.l.b16 %v229
    %v493 = vunpack.c.l.b16 %v230
    %v494 = vunpack.c.l.b16 %v231
    %v495 = vunpack.c.l.b16 %v232
    %v496 = vunpack.c.l.b16 %v233
    %v497 = vunpack.c.l.b16 %v234
    %v498 = vunpack.c.l.b16 %v235
    %v499 = vunpack.c.l.b16 %v236
    %v500 = vunpack.c.l.b16 %v237
    %v501 = vunpack.c.l.b16 %v238
    %v502 = vunpack.c.l.b16 %v239
    %v503 = vunpack.c.l.b16 %v240
    %v504 = vunpack.c.l.b16 %v241
    %v505 = vunpack.c.l.b16 %v242
    %v506 = vunpack.c.l.b16 %v243
    %v507 = vunpack.c.l.b16 %v244
    %v508 = vunpack.c.l.b16 %v245
    %v509 = vunpack.c.l.b16 %v246
    %v510 = vunpack.c.l.b16 %v247
    %v511 = vunpack.c.l.b16 %v248
    %v512 = vunpack.c.l.b16 %v249
    %v513 = vunpack.c.l.b16 %v250
    %v514 = vunpack.c.l.b16 %v251
    %v515 = vunpack.c.l.b16 %v252
    %v516 = vunpack.c.l.b16 %v253
    %v517 = vunpack.c.l.b16 %v254
    %v518 = vunpack.c.l.b16 %v255
    %v519 = vunpack.c.l.b16 %v256
    %v520 = vunpack.c.l.b16 %v257
    %v521 = vunpack.c.l.b16 %v258
    %v522 = vunpack.c.l.b16 %v259
    %v523 = vunpack.c.l.b16 %v260
    %v524 = vunpack.c.l.b16 %v261
    %v525 = vunpack.c.l.b16 %v262
    %v526 = vunpack.c.l.b16 %v263
    %v527 = vunpack.c.l.b16 %v264
    %v528 = vunpack.c.l.b16 %v265
    %v529 = vunpack.c.l.b16 %v266
    %v530 = vunpack.c.l.b16 %v267
    %v531 = vunpack.c.l.b16 %v268
    %v532 = vunpack.c.l.b16 %v269
    %v533 = vunpack.c.l.b16 %v270
    %v534 = vunpack.c.l.b16 %v271
    %v535 = vunpack.c.l.b16 %v272
    %v536 = vunpack.c.l.b16 %v273
    %v537 = vunpack.c.l.b16 %v274
    %v538 = vunpack.c.l.b16 %v275
    %v539 = vunpack.c.l.b16 %v276
    %v540 = vunpack.c.l.b16 %v277
    %v541 = vunpack.c.l.b16 %v278
    %v542 = vunpack.c.l.b16 %v279
    %v543 = vunpack.c.l.b16 %v280
    %v544 = vunpack.c.l.b16 %v281
    %v545 = vunpack.c.l.b16 %v282
    %v546 = vunpack.c.l.b16 %v283
    %v547 = vunpack.c.l.b16 %v284
    %v548 = vunpack.c.l.b16 %v285
    %v549 = vunpack.c.l.b16 %v286
    %v550 = vunpack.c.l.b16 %v287
    %v551 = vunpack.c.l.b16 %v288
    %v552 = vunpack.c.l.b16 %v289
    %v553 = vunpack.c.l.b16 %v290
    %v554 = vunpack.c.l.b16 %v291
    %v555 = vunpack.c.l.b16 %v292
    %v556 = vunpack.c.l.b16 %v293
    %v557 = vunpack.c.l.b16 %v294
    %v558 = vpack.c.b16 %v431, %v430
    %v559 = vpack.c.b16 %v433, %v432
    %v560 = vpack.c.b16 %v435, %v434
    %v561 = vpack.c.b16 %v437, %v436
    %v562 = vpack.c.b16 %v439, %v438
    %v563 = vpack.c.b16 %v441, %v440
    %v564 = vpack.c.b16 %v443, %v442
    %v565 = vpack.c.b16 %v445, %v444
    %v566 = vpack.c.b16 %v447, %v446
    %v567 = vpack.c.b16 %v449, %v448
    %v568 = vpack.c.b16 %v451, %v450
    %v569 = vpack.c.b16 %v453, %v452
    %v570 = vpack.c.b16 %v455, %v454
    %v571 = vpack.c.b16 %v457, %v456
    %v572 = vpack.c.b16 %v459, %v458
    %v573 = vpack.c.b16 %v461, %v460
    %v574 = vpack.c.b16 %v463, %v462
    %v575 = vpack.c.b16 %v465, %v464
    %v576 = vpack.c.b16 %v467, %v466
    %v577 = vpack.c.b16 %v469, %v468
    %v578 = vpack.c.b16 %v471, %v470
    %v579 = vpack.c.b16 %v473, %v472
    %v580 = vpack.c.b16 %v475, %v474
    %v581 = vpack.c.b16 %v477, %v476
    %v582 = vpack.c.b16 %v479, %v478
    %v583 = vpack.c.b16 %v481, %v480
    %v584 = vpack.c.b16 %v483, %v482
    %v585 = vpack.c.b16 %v485, %v484
    %v586 = vpack.c.b16 %v487, %v486
    %v587 = vpack.c.b16 %v489, %v488
    %v588 = vpack.c.b16 %v491, %v490
    %v589 = vpack.c.b16 %v493, %v492
    %v590 = vpack.c.b16 %v495, %v494
    %v591 = vpack.c.b16 %v497, %v496
    %v592 = vpack.c.b16 %v499, %v498
    %v593 = vpack.c.b16 %v501, %v500
    %v594 = vpack.c.b16 %v503, %v502
    %v595 = vpack.c.b16 %v505, %v504
    %v596 = vpack.c.b16 %v507, %v506
    %v597 = vpack.c.b16 %v509, %v508
    %v598 = vpack.c.b16 %v511, %v510
    %v599 = vpack.c.b16 %v513, %v512
    %v600 = vpack.c.b16 %v515, %v514
    %v601 = vpack.c.b16 %v517, %v516
    %v602 = vpack.c.b16 %v519, %v518
    %v603 = vpack.c.b16 %v521, %v520
    %v604 = vpack.c.b16 %v523, %v522
    %v605 = vpack.c.b16 %v525, %v524
    %v606 = vpack.c.b16 %v527, %v526
    %v607 = vpack.c.b16 %v529, %v528
    %v608 = vpack.c.b16 %v531, %v530
    %v609 = vpack.c.b16 %v533, %v532
    %v610 = vpack.c.b16 %v535, %v534
    %v611 = vpack.c.b16 %v537, %v536
    %v612 = vpack.c.b16 %v539, %v538
    %v613 = vpack.c.b16 %v541, %v540
    %v614 = vpack.c.b16 %v543, %v542
    %v615 = vpack.c.b16 %v545, %v544
    %v616 = vpack.c.b16 %v547, %v546
    %v617 = vpack.c.b16 %v549, %v548
    %v618 = vpack.c.b16 %v551, %v550
    %v619 = vpack.c.b16 %v553, %v552
    %v620 = vpack.c.b16 %v555, %v554
    %v621 = vpack.c.b16 %v557, %v556
    %686 = vmatprep.subr.bf16.mxu0 0
    %687 = vmatpush1.bf16.msra.mxu0 %v558
    %688 = vmatprep.subr.bf16.mxu0 0
    %689 = vmatpush1.bf16.msra.mxu0 %v559
    %690 = vmatprep.subr.bf16.mxu0 0
    %691 = vmatpush1.bf16.msra.mxu0 %v560
    %692 = vmatprep.subr.bf16.mxu0 0
    %693 = vmatpush1.bf16.msra.mxu0 %v561
    %694 = vmatprep.subr.bf16.mxu0 0
    %695 = vmatpush1.bf16.msra.mxu0 %v562
    %696 = vmatprep.subr.bf16.mxu0 0
    %697 = vmatpush1.bf16.msra.mxu0 %v563
    %698 = vmatprep.subr.bf16.mxu0 0
    %699 = vmatpush1.bf16.msra.mxu0 %v564
    %700 = vmatprep.subr.bf16.mxu0 0
    %701 = vmatpush1.bf16.msra.mxu0 %v565
    %702 = vmatprep.subr.bf16.mxu0 0
    %703 = vmatpush1.bf16.msra.mxu0 %v566
    %704 = vmatprep.subr.bf16.mxu0 0
    %705 = vmatpush1.bf16.msra.mxu0 %v567
    %706 = vmatprep.subr.bf16.mxu0 0
    %707 = vmatpush1.bf16.msra.mxu0 %v568
    %708 = vmatprep.subr.bf16.mxu0 0
    %709 = vmatpush1.bf16.msra.mxu0 %v569
    %710 = vmatprep.subr.bf16.mxu0 0
    %711 = vmatpush1.bf16.msra.mxu0 %v570
    %712 = vmatprep.subr.bf16.mxu0 0
    %713 = vmatpush1.bf16.msra.mxu0 %v571
    %714 = vmatprep.subr.bf16.mxu0 0
    %715 = vmatpush1.bf16.msra.mxu0 %v572
    %716 = vmatprep.subr.bf16.mxu0 0
    %717 = vmatpush1.bf16.msra.mxu0 %v573
    %718 = vmatprep.mubr.bf16.mxu0 %v160
    %719 = vmatmul.mubr.bf16.gmra.mrb[0].mxu0 %v159
    %v720 = vpop.f32.mrb[0].mxu0
    %v721 = vadd.f32 %v300, %v720
    %v722 = vpop.f32.mrb[0].mxu0
    %v723 = vpop.f32.mrb[0].mxu0
    %v724 = vpop.f32.mrb[0].mxu0
    %725 = vdwg.mxu0
    %726 = vmatprep.subr.bf16.mxu0 0
    %727 = vmatpush1.bf16.msra.mxu0 %v574
    %728 = vmatprep.subr.bf16.mxu0 0
    %729 = vmatpush1.bf16.msra.mxu0 %v575
    %730 = vmatprep.subr.bf16.mxu0 0
    %731 = vmatpush1.bf16.msra.mxu0 %v576
    %732 = vmatprep.subr.bf16.mxu0 0
    %733 = vmatpush1.bf16.msra.mxu0 %v577
    %734 = vmatprep.subr.bf16.mxu0 0
    %735 = vmatpush1.bf16.msra.mxu0 %v578
    %736 = vmatprep.subr.bf16.mxu0 0
    %737 = vmatpush1.bf16.msra.mxu0 %v579
    %738 = vmatprep.subr.bf16.mxu0 0
    %739 = vmatpush1.bf16.msra.mxu0 %v580
    %740 = vmatprep.subr.bf16.mxu0 0
    %741 = vmatpush1.bf16.msra.mxu0 %v581
    %742 = vmatprep.subr.bf16.mxu0 0
    %743 = vmatpush1.bf16.msra.mxu0 %v582
    %744 = vmatprep.subr.bf16.mxu0 0
    %745 = vmatpush1.bf16.msra.mxu0 %v583
    %746 = vmatprep.subr.bf16.mxu0 0
    %747 = vmatpush1.bf16.msra.mxu0 %v584
    %748 = vmatprep.subr.bf16.mxu0 0
    %749 = vmatpush1.bf16.msra.mxu0 %v585
    %750 = vmatprep.subr.bf16.mxu0 0
    %751 = vmatpush1.bf16.msra.mxu0 %v586
    %752 = vmatprep.subr.bf16.mxu0 0
    %753 = vmatpush1.bf16.msra.mxu0 %v587
    %754 = vmatprep.subr.bf16.mxu0 0
    %755 = vmatpush1.bf16.msra.mxu0 %v588
    %756 = vmatprep.subr.bf16.mxu0 0
    %757 = vmatpush1.bf16.msra.mxu0 %v589
    %758 = vmatprep.mubr.bf16.mxu0 %v162
    %759 = vmatmul.mubr.bf16.gmra.mrb[0].mxu0 %v161
    %v760 = vpop.f32.mrb[0].mxu0
    %v761 = vadd.f32 %v721, %v760
    %v762 = vpop.f32.mrb[0].mxu0
    %v763 = vpop.f32.mrb[0].mxu0
    %v764 = vpop.f32.mrb[0].mxu0
    %765 = vdwg.mxu0
    %766 = vmatprep.subr.bf16.mxu0 0
    %767 = vmatpush1.bf16.msra.mxu0 %v590
    %768 = vmatprep.subr.bf16.mxu0 0
    %769 = vmatpush1.bf16.msra.mxu0 %v591
    %770 = vmatprep.subr.bf16.mxu0 0
    %771 = vmatpush1.bf16.msra.mxu0 %v592
    %772 = vmatprep.subr.bf16.mxu0 0
    %773 = vmatpush1.bf16.msra.mxu0 %v593
    %774 = vmatprep.subr.bf16.mxu0 0
    %775 = vmatpush1.bf16.msra.mxu0 %v594
    %776 = vmatprep.subr.bf16.mxu0 0
    %777 = vmatpush1.bf16.msra.mxu0 %v595
    %778 = vmatprep.subr.bf16.mxu0 0
    %779 = vmatpush1.bf16.msra.mxu0 %v596
    %780 = vmatprep.subr.bf16.mxu0 0
    %781 = vmatpush1.bf16.msra.mxu0 %v597
    %782 = vmatprep.subr.bf16.mxu0 0
    %783 = vmatpush1.bf16.msra.mxu0 %v598
    %784 = vmatprep.subr.bf16.mxu0 0
    %785 = vmatpush1.bf16.msra.mxu0 %v599
    %786 = vmatprep.subr.bf16.mxu0 0
    %787 = vmatpush1.bf16.msra.mxu0 %v600
    %788 = vmatprep.subr.bf16.mxu0 0
    %789 = vmatpush1.bf16.msra.mxu0 %v601
    %790 = vmatprep.subr.bf16.mxu0 0
    %791 = vmatpush1.bf16.msra.mxu0 %v602
    %792 = vmatprep.subr.bf16.mxu0 0
    %793 = vmatpush1.bf16.msra.mxu0 %v603
    %794 = vmatprep.subr.bf16.mxu0 0
    %795 = vmatpush1.bf16.msra.mxu0 %v604
    %796 = vmatprep.subr.bf16.mxu0 0
    %797 = vmatpush1.bf16.msra.mxu0 %v605
    %798 = vmatprep.mubr.bf16.mxu0 %v164
    %799 = vmatmul.mubr.bf16.gmra.mrb[0].mxu0 %v163
    %v800 = vpop.f32.mrb[0].mxu0
    %v801 = vadd.f32 %v761, %v800
    %v802 = vpop.f32.mrb[0].mxu0
    %v803 = vpop.f32.mrb[0].mxu0
    %v804 = vpop.f32.mrb[0].mxu0
    %805 = vdwg.mxu0
    %806 = vmatprep.subr.bf16.mxu0 0
    %807 = vmatpush1.bf16.msra.mxu0 %v606
    %808 = vmatprep.subr.bf16.mxu0 0
    %809 = vmatpush1.bf16.msra.mxu0 %v607
    %810 = vmatprep.subr.bf16.mxu0 0
    %811 = vmatpush1.bf16.msra.mxu0 %v608
    %812 = vmatprep.subr.bf16.mxu0 0
    %813 = vmatpush1.bf16.msra.mxu0 %v609
    %814 = vmatprep.subr.bf16.mxu0 0
    %815 = vmatpush1.bf16.msra.mxu0 %v610
    %816 = vmatprep.subr.bf16.mxu0 0
    %817 = vmatpush1.bf16.msra.mxu0 %v611
    %818 = vmatprep.subr.bf16.mxu0 0
    %819 = vmatpush1.bf16.msra.mxu0 %v612
    %820 = vmatprep.subr.bf16.mxu0 0
    %821 = vmatpush1.bf16.msra.mxu0 %v613
    %822 = vmatprep.subr.bf16.mxu0 0
    %823 = vmatpush1.bf16.msra.mxu0 %v614
    %824 = vmatprep.subr.bf16.mxu0 0
    %825 = vmatpush1.bf16.msra.mxu0 %v615
    %826 = vmatprep.subr.bf16.mxu0 0
    %827 = vmatpush1.bf16.msra.mxu0 %v616
    %828 = vmatprep.subr.bf16.mxu0 0
    %829 = vmatpush1.bf16.msra.mxu0 %v617
    %830 = vmatprep.subr.bf16.mxu0 0
    %831 = vmatpush1.bf16.msra.mxu0 %v618
    %832 = vmatprep.subr.bf16.mxu0 0
    %833 = vmatpush1.bf16.msra.mxu0 %v619
    %834 = vmatprep.subr.bf16.mxu0 0
    %835 = vmatpush1.bf16.msra.mxu0 %v620
    %836 = vmatprep.subr.bf16.mxu0 0
    %837 = vmatpush1.bf16.msra.mxu0 %v621
    %838 = vmatprep.mubr.bf16.mxu0 %v166
    %839 = vmatmul.mubr.bf16.gmra.mrb[0].mxu0 %v165
    %v840 = vpop.f32.mrb[0].mxu0
    %v841 = vadd.f32 %v801, %v840
    %v842 = vpop.f32.mrb[0].mxu0
    %v843 = vpop.f32.mrb[0].mxu0
    %v844 = vpop.f32.mrb[0].mxu0
    %845 = vdwg.mxu0
    %v846 = vmax.f32 %v841, 0.0
    %v847 = vpack.c.bf16 %v846, %v846
    %v848 = vld [vmem:[#allocation7] sm:$0xf]
    %v849 = vld [vmem:[#allocation7 + $0x4] sm:$0xf]
    %v850 = vld [vmem:[#allocation7 + $0x8] sm:$0xf]
    %v851 = vld [vmem:[#allocation7 + $0xc] sm:$0xf]
    %v852 = vld [vmem:[#allocation7 + $0x10] sm:$0xf]
    %v853 = vld [vmem:[#allocation7 + $0x14] sm:$0xf]
    %v854 = vld [vmem:[#allocation7 + $0x18] sm:$0xf]
    %v855 = vld [vmem:[#allocation7 + $0x1c] sm:$0xf]
    %v856 = vld [vmem:[#allocation7 + $0x20] sm:$0xf]
    %v857 = vld [vmem:[#allocation7 + $0x24] sm:$0xf]
    %v858 = vld [vmem:[#allocation7 + $0x28] sm:$0xf]
    %v859 = vld [vmem:[#allocation7 + $0x2c] sm:$0xf]
    %v860 = vld [vmem:[#allocation7 + $0x30] sm:$0xf]
    %v861 = vld [vmem:[#allocation7 + $0x34] sm:$0xf]
    %v862 = vld [vmem:[#allocation7 + $0x38] sm:$0xf]
    %v863 = vld [vmem:[#allocation7 + $0x3c] sm:$0xf]
    %v864 = vld [vmem:[%s4] sm:$0x1]
    %v866 = vlaneseq
    %v867 = vshrl.u32 %v866, 7
    %v868 = vsub.s32 0, %v867
    %v869 = vrot.slane %v864, %v868
    %v887 = vunpack.c.l.b16 %v848
    %v888 = vunpack.c.l.b16 %v849
    %v889 = vunpack.c.l.b16 %v850
    %v890 = vunpack.c.l.b16 %v851
    %v891 = vunpack.c.l.b16 %v852
    %v892 = vunpack.c.l.b16 %v853
    %v893 = vunpack.c.l.b16 %v854
    %v894 = vunpack.c.l.b16 %v855
    %v895 = vunpack.c.l.b16 %v856
    %v896 = vunpack.c.l.b16 %v857
    %v897 = vunpack.c.l.b16 %v858
    %v898 = vunpack.c.l.b16 %v859
    %v899 = vunpack.c.l.b16 %v860
    %v900 = vunpack.c.l.b16 %v861
    %v901 = vunpack.c.l.b16 %v862
    %v902 = vunpack.c.l.b16 %v863
    %v903 = vpack.c.b16 %v888, %v887
    %v904 = vpack.c.b16 %v890, %v889
    %v905 = vpack.c.b16 %v892, %v891
    %v906 = vpack.c.b16 %v894, %v893
    %v907 = vpack.c.b16 %v896, %v895
    %v908 = vpack.c.b16 %v898, %v897
    %v909 = vpack.c.b16 %v900, %v899
    %v910 = vpack.c.b16 %v902, %v901
    %919 = vmatprep.subr.bf16.mxu0 0
    %920 = vmatpush1.bf16.msra.mxu0 %v903
    %921 = vmatprep.subr.bf16.mxu0 0
    %922 = vmatpush1.bf16.msra.mxu0 %v904
    %923 = vmatprep.subr.bf16.mxu0 0
    %924 = vmatpush1.bf16.msra.mxu0 %v905
    %925 = vmatprep.subr.bf16.mxu0 0
    %926 = vmatpush1.bf16.msra.mxu0 %v906
    %927 = vmatprep.subr.bf16.mxu0 0
    %928 = vmatpush1.bf16.msra.mxu0 %v907
    %929 = vmatprep.subr.bf16.mxu0 0
    %930 = vmatpush1.bf16.msra.mxu0 %v908
    %931 = vmatprep.subr.bf16.mxu0 0
    %932 = vmatpush1.bf16.msra.mxu0 %v909
    %933 = vmatprep.subr.bf16.mxu0 0
    %934 = vmatpush1.bf16.msra.mxu0 %v910
    %935 = vmatprep.subr.bf16.mxu0 0
    %936 = vmatpush1.bf16.msra.mxu0 0
    %937 = vmatprep.subr.bf16.mxu0 0
    %938 = vmatpush1.bf16.msra.mxu0 0
    %939 = vmatprep.subr.bf16.mxu0 0
    %940 = vmatpush1.bf16.msra.mxu0 0
    %941 = vmatprep.subr.bf16.mxu0 0
    %942 = vmatpush1.bf16.msra.mxu0 0
    %943 = vmatprep.subr.bf16.mxu0 0
    %944 = vmatpush1.bf16.msra.mxu0 0
    %945 = vmatprep.subr.bf16.mxu0 0
    %946 = vmatpush1.bf16.msra.mxu0 0
    %947 = vmatprep.subr.bf16.mxu0 0
    %948 = vmatpush1.bf16.msra.mxu0 0
    %949 = vmatprep.subr.bf16.mxu0 0
    %950 = vmatpush1.bf16.msra.mxu0 0
    %951 = vmatprep.mubr.bf16.mxu0 0
    %952 = vmatmul.mubr.bf16.gmra.mrb[0].mxu0 %v847
    %v953 = vpop.f32.mrb[0].mxu0
    %v954 = vadd.f32 %v869, %v953
    %v955 = vpop.f32.mrb[0].mxu0
    %v956 = vpop.f32.mrb[0].mxu0
    %v957 = vpop.f32.mrb[0].mxu0
    %958 = vdwg.mxu0
    %v959 = vpack.c.bf16 %v954, %v954
    %v962 = vunpack.c.l.s4 1966171168
    %v963 = vunpack.c.0.s8 %v962
    %v964 = vlaneseq
    %v965 = vshrl.u32 %v964, 7
    %v966 = vsub.s32 %v963, %v965
    %v967 = vrot.slane %v959, %v966
    %v968 = vcombine.high %v967, %v967
    %v970 = vunpack.c.l.s4 1966171168
    %v971 = vunpack.c.0.s8 %v970
    %v972 = vlaneseq
    %v973 = vshrl.u32 %v972, 7
    %v974 = vsub.s32 %v971, %v973
    %v975 = vrot.slane %v967, %v974
    %v977 = vunpack.c.l.s4 1966171168
    %v978 = vunpack.c.0.s8 %v977
    %v979 = vlaneseq
    %v980 = vshrl.u32 %v979, 7
    %v981 = vsub.s32 %v978, %v980
    %v982 = vrot.slane %v968, %v981
    %v983 = vcombine.high %v975, %v975
    %v984 = vcombine.high %v982, %v982
    %989 = vst [vmem:[#allocation8] sm:$0x1] %v975
    %990 = vst [vmem:[#allocation8 + $0x1] sm:$0x1] %v982
    %991 = vst [vmem:[#allocation8 + $0x2] sm:$0x1] %v983
    %992 = vst [vmem:[#allocation8 + $0x3] sm:$0x1] %v984
    // Predicated region
    $region34: #{tpu_custom_call.1} parent=1 // pred_check
      _
    $region35: #{tpu_custom_call.1} parent=1 // pred_check_branch
      %994 = sbr.rel (0) target = $region37
    $region36: #{tpu_custom_call.1} parent=1 // pred_region
      %s996 = ssub.s32 64, 16
      %997 = vsyncadd [#allocation4], %s996
      %s998 = sshll.u32 [#allocation8], 4
      %s999 = int_to_ptr.vmem [resolvable:$true] %s998
      %1004 = dma.vmem_to_hbm [thread:$0]  %s999, 16, %s5, [#allocation4], 16, 16, 1
    $region37: #{tpu_custom_call.1} parent=1 // pred_fallthru
      _
    // Predicated region
    $region38: #{tpu_custom_call.1} parent=1 // pred_check
      _
    $region39: #{tpu_custom_call.1} parent=1 // pred_check_branch
      %1006 = sbr.rel (0) target = $region41
    $region40: #{tpu_custom_call.1} parent=1 // pred_region
      %1007 = dma.done [#allocation4], 64
    $region41: #{tpu_custom_call.1} parent=1 // pred_fallthru
      _
    %1008 = vsyncpa [#allocation3], 1
    %1009 = vsyncpa [#allocation6], 1
    %1010 = vsyncpa [#allocation4], 1

</llo_original>
